<compile_context>
chip_gen: v7x
topology: tpu7x:2x2x1
jax: 0.10.0
libtpu: 0.0.40
codegen_flags: <defaults>
</compile_context>

<pallas_src>
import functools

import jax
import jax.numpy as jnp
from jax import lax
from jax.experimental import pallas as pl
from jax.experimental.pallas import tpu as pltpu

NUM_CLASSES = 3        # {'background': 0, 'comparison': 1, 'negative': 2}
HIDDEN = 768           # nn.Linear(768, len(classes))
C_PAD = 128            # lane-dense padded class dimension
NEG_BIAS = -1e30       # padded-class bias (logits stay f32 -> exp underflows to 0)
TB_CAP = 128           # batch-tile cap: v5e MXU 128x128 sweet spot, fine elsewhere
EMB_PIPE_BUDGET = 20 << 20   # bytes budgeted for emb double-buffer + f32 temp + acc


def _round_up(x, m):
    return (x + m - 1) // m * m


def _choose_tiles(B, S, H, emb_itemsize):
    """Pick (TB, TS) so double-buffered emb + in-kernel f32 temporaries fit VMEM."""
    # Sequence tile: full sequence when short (single seq step), else 128-wide tiles
    # (layout-legal for both the (TB,TS,H) emb block and the (TB,TS) mask block).
    TS = S if S <= 128 else 128
    # Bytes per batch row per grid step:
    #   2 pipelined emb buffers + f32 weighted-sum temporary + f32 accumulator row.
    per_row = TS * H * (2 * emb_itemsize + 4) + H * 4
    tb_fit = max(8, (EMB_PIPE_BUDGET // per_row) // 8 * 8)
    if B <= 8:
        TB = B                                        # block == full batch dim (layout-legal)
    else:
        tb_half = max(8, _round_up(-(-B // 2), 8))    # aim for >=2 batch tiles (v7x megacore)
        TB = max(8, min(tb_fit, tb_half, TB_CAP) // 8 * 8)
    return TB, TS


# ---------------------------------------------------------------------------
# Pallas kernel: masked-mean pool (accumulated over seq tiles) -> tanh ->
#                dropout(identity) -> linear -> softmax
# ---------------------------------------------------------------------------
def fused_pool_cls_kernel(emb_ref, mw_ref, w_ref, b_ref, o_ref, acc_ref, *, ts, s_total):
    # emb_ref : (TB, TS, H) bf16/f32  token hidden states (native LM dtype)
    # mw_ref  : (TB, TS)    f32       normalized mask weights (mask / token_count)
    # w_ref   : (H, C_PAD)  bf16      linear weight, zero past NUM_CLASSES (resident)
    # b_ref   : (1, C_PAD)  f32       linear bias, NEG_BIAS past NUM_CLASSES (resident)
    # o_ref   : (TB, C_PAD) f32       softmax probabilities (padded lanes ~ 0)
    # acc_ref : (TB, H)     f32       pooled weighted-sum accumulator across seq tiles
    j = pl.program_id(1)

    @pl.when(j == 0)
    def _():
        acc_ref[...] = jnp.zeros_like(acc_ref)

    emb = emb_ref[...].astype(jnp.float32)            # per-tile upcast in VMEM (no-op if f32)
    contrib = emb * mw_ref[...][:, :, None]           # (TB, TS, H) f32 — budgeted temporary
    if s_total % ts != 0:                             # static: only emitted for ragged seq tail
        pos = j * ts + lax.broadcasted_iota(jnp.int32, contrib.shape[:2], 1)
        contrib = jnp.where((pos < s_total)[:, :, None], contrib, 0.0)
    acc_ref[...] += jnp.sum(contrib, axis=1)          # (TB, H)

    @pl.when(j == pl.num_programs(1) - 1)
    def _():
        pooled = jnp.tanh(acc_ref[...])               # (TB, H)
        # nn.Dropout is the identity at inference; training-mode RNG dropout omitted.
        logits = jnp.dot(pooled.astype(jnp.bfloat16), w_ref[...],
                         preferred_element_type=jnp.float32) + b_ref[...]   # (TB, C_PAD)
        mx = jnp.max(logits, axis=-1, keepdims=True)
        e = jnp.exp(logits - mx)
        s = jnp.sum(e, axis=-1, keepdims=True)
        o_ref[...] = (e * pl.reciprocal(s, approx=True)).astype(o_ref.dtype)


def cs_head(emb, mask, weight, bias):
    """emb: (B, S, 768) float (any float dtype), mask: (B, S), weight: (768, 3),
    bias: (3,) -> (B, 3) f32 softmax probabilities."""
    B, S, H = emb.shape
    C = weight.shape[1]
    assert H == HIDDEN and C <= C_PAD

    # Normalized mask weights precomputed in the wrapper: tiny (B, S) array, removes
    # the per-tile row-sum / clamp / divide from the kernel.
    m = mask.astype(jnp.float32)
    mask_w = m / jnp.maximum(jnp.sum(m, axis=1, keepdims=True), 1.0)

    # Lane-dense padded classifier params (tiny; bf16 weight feeds the MXU).
    w_pad = jnp.zeros((H, C_PAD), jnp.bfloat16).at[:, :C].set(weight.astype(jnp.bfloat16))
    b_pad = jnp.full((1, C_PAD), NEG_BIAS, jnp.float32).at[0, :C].set(
        bias.astype(jnp.float32))

    emb_itemsize = jnp.dtype(emb.dtype).itemsize
    TB, TS = _choose_tiles(B, S, H, emb_itemsize)
    grid = (pl.cdiv(B, TB), pl.cdiv(S, TS))

    # Explicit VMEM accounting: emb double-buffer + f32 product temp + accumulator +
    # mask buffers + resident weight/bias (constant index_map) + output blocks.
    vmem_bytes = (2 * TB * TS * H * emb_itemsize      # emb pipeline buffers
                  + TB * TS * H * 4                   # weighted-sum temporary
                  + TB * H * 4                        # accumulator scratch
                  + 2 * TB * TS * 4                   # mask-weight pipeline buffers
                  + 2 * (H * C_PAD * 2 + C_PAD * 4 + TB * C_PAD * 4))
    vmem_limit = min(48 << 20, max(20 << 20, int(1.3 * vmem_bytes)))

    kernel = functools.partial(fused_pool_cls_kernel, ts=TS, s_total=S)
    out = pl.pallas_call(
        kernel,
        out_shape=jax.ShapeDtypeStruct((B, C_PAD), jnp.float32),
        grid_spec=pltpu.PrefetchScalarGridSpec(
            num_scalar_prefetch=0,
            grid=grid,
            in_specs=[
                pl.BlockSpec((TB, TS, H), lambda i, j: (i, j, 0)),   # emb: batch x seq tiles
                pl.BlockSpec((TB, TS), lambda i, j: (i, j)),          # mask weights
                pl.BlockSpec((H, C_PAD), lambda i, j: (0, 0)),        # weight: resident block
                pl.BlockSpec((1, C_PAD), lambda i, j: (0, 0)),        # bias: resident block
            ],
            out_specs=pl.BlockSpec((TB, C_PAD), lambda i, j: (i, 0)),
            scratch_shapes=[pltpu.VMEM((TB, H), jnp.float32)],
        ),
        compiler_params=pltpu.CompilerParams(
            dimension_semantics=("parallel", "arbitrary"),   # batch tiles megacore-shardable
            vmem_limit_bytes=vmem_limit),
    )(emb, mask_w, w_pad, b_pad)
    return out[:, :C]


# ---------------------------------------------------------------------------
# Plain-JAX glue: synthetic stand-in for the pretrained LM's hidden states
# ---------------------------------------------------------------------------
def synthetic_lm_embed(input_id, emb_table):
    # TODO(synk): the pretrained AutoModel forward (BERT encoder + CLS pooler) is not
    # translated; a deterministic bf16 embedding lookup stands in for its token-level
    # hidden states (bf16 at the source -> no wrapper-side cast pass over the big tensor).
    return emb_table[input_id]                                   # (B, S, HIDDEN)


def init_params(key, vocab=32):
    k_emb, k_w, k_b = jax.random.split(key, 3)
    emb_table = (jax.random.normal(k_emb, (vocab, HIDDEN), jnp.float32) * 0.02
                 ).astype(jnp.bfloat16)
    # nn.Linear(768, 3): stored transposed (768, 3) for x @ W
    w = jax.random.normal(k_w, (HIDDEN, NUM_CLASSES), jnp.float32) * (1.0 / HIDDEN ** 0.5)
    b = jax.random.normal(k_b, (NUM_CLASSES,), jnp.float32) * 0.01
    return emb_table, w, b


def cs_classifier_forward(input_id, mask, emb_table, w, b):
    emb = synthetic_lm_embed(input_id, emb_table)                # (B, S, 768)
    return cs_head(emb, mask, w, b)                              # (B, 3) softmax probs


if __name__ == "__main__":
    key = jax.random.PRNGKey(0)
    k_ids, k_params = jax.random.split(key)

    B, S, VOCAB = 2, 8, 32
    input_id = jax.random.randint(k_ids, (B, S), 0, VOCAB, dtype=jnp.int32)
    mask = jnp.ones((B, S), dtype=jnp.int32).at[1, S // 2:].set(0)   # ragged mask

    emb_table, w, b = init_params(k_params, VOCAB)

    probs = cs_classifier_forward(input_id, mask, emb_table, w, b)
    probs = jax.block_until_ready(probs)

    # Pure-JAX f32 reference over the same (bf16) hidden states.
    emb_ref = emb_table[input_id].astype(jnp.float32)
    m_ref = mask.astype(jnp.float32)[..., None]
    pooled_ref = jnp.tanh((emb_ref * m_ref).sum(axis=1) /
                          jnp.maximum(m_ref.sum(axis=1), 1.0))
    ref = jax.nn.softmax(pooled_ref @ w + b, axis=-1)

    assert probs.shape == (B, NUM_CLASSES)
    assert bool(jnp.allclose(jnp.sum(probs, axis=-1), 1.0, atol=1e-2))   # softmax rows
    assert bool(jnp.allclose(probs, ref, atol=2e-2))                      # bf16 tolerance

    print("KERNEL_OK")
</pallas_src>

<mosaic_0001>
module attributes {stable_mosaic.version = 11 : i64} {
  func.func @fused_pool_cls_kernel(%arg0: i32, %arg1: i32, %arg2: memref<2x8x768xbf16, #tpu.memory_space<vmem>>, %arg3: memref<2x8xf32, #tpu.memory_space<vmem>>, %arg4: memref<768x128xbf16, #tpu.memory_space<vmem>>, %arg5: memref<1x128xf32, #tpu.memory_space<vmem>>, %arg6: memref<2x128xf32, #tpu.memory_space<vmem>>, %arg7: memref<2x768xf32, #tpu.memory_space<vmem>>) attributes {dimension_semantics = [#tpu.dimension_semantics<parallel>, #tpu.dimension_semantics<arbitrary>], iteration_bounds = array<i64: 1, 1>, scalar_prefetch = 0 : i64, scratch_operands = 1 : i64, tpu.core_type = #tpu.core_type<tc>, window_params = [{transform_indices = @transform_0, window_bounds = array<i64: 2, 8, 768>}, {transform_indices = @transform_1, window_bounds = array<i64: 2, 8>}, {pipeline_mode = #tpu.pipeline_mode<synchronous>, transform_indices = @transform_2, window_bounds = array<i64: 768, 128>}, {pipeline_mode = #tpu.pipeline_mode<synchronous>, transform_indices = @transform_3, window_bounds = array<i64: 1, 128>}, {transform_indices = @transform_4, window_bounds = array<i64: 2, 128>}]} {
    %c0_i32 = arith.constant 0 : i32
    %0 = arith.cmpi eq, %arg1, %c0_i32 : i32
    %1 = arith.extui %0 : i1 to i32
    %c0_i32_0 = arith.constant 0 : i32
    %2 = arith.cmpi ne, %1, %c0_i32_0 : i32
    scf.if %2 {
      %cst_11 = arith.constant 0.000000e+00 : f32
      %16 = vector.broadcast %cst_11 : f32 to vector<2x768xf32>
      %c0_12 = arith.constant 0 : index
      %c0_13 = arith.constant 0 : index
      %17 = vector.load %arg7[%c0_12, %c0_13] : memref<2x768xf32, #tpu.memory_space<vmem>>, vector<2x768xf32>
      tpu.vector_store %arg7[%c0_12, %c0_13], %16 {strides = array<i32>} : memref<2x768xf32, #tpu.memory_space<vmem>>, vector<2x768xf32>,
    } else {
    }
    %c0 = arith.constant 0 : index
    %c0_1 = arith.constant 0 : index
    %c0_2 = arith.constant 0 : index
    %3 = vector.load %arg2[%c0, %c0_1, %c0_2] : memref<2x8x768xbf16, #tpu.memory_space<vmem>>, vector<2x8x768xbf16>
    %4 = arith.extf %3 : vector<2x8x768xbf16> to vector<2x8x768xf32>
    %c0_3 = arith.constant 0 : index
    %c0_4 = arith.constant 0 : index
    %5 = vector.load %arg3[%c0_3, %c0_4] : memref<2x8xf32, #tpu.memory_space<vmem>>, vector<2x8xf32>
    %6 = vector.shape_cast %5 : vector<2x8xf32> to vector<2x8x1xf32>
    %7 = vector.broadcast %6 : vector<2x8x1xf32> to vector<2x8x768xf32>
    %8 = arith.mulf %4, %7 : vector<2x8x768xf32>
    %c0_5 = arith.constant 0 : index
    %c0_6 = arith.constant 0 : index
    %9 = vector.load %arg7[%c0_5, %c0_6] : memref<2x768xf32, #tpu.memory_space<vmem>>, vector<2x768xf32>
    %cst = arith.constant dense<0.000000e+00> : vector<2x768xf32>
    %10 = vector.multi_reduction <add>, %8, %cst [1] : vector<2x8x768xf32> to vector<2x768xf32>
    %11 = arith.addf %9, %10 : vector<2x768xf32>
    %c0_7 = arith.constant 0 : index
    %c0_8 = arith.constant 0 : index
    %12 = vector.load %arg7[%c0_7, %c0_8] : memref<2x768xf32, #tpu.memory_space<vmem>>, vector<2x768xf32>
    tpu.vector_store %arg7[%c0_7, %c0_8], %11 {strides = array<i32>} : memref<2x768xf32, #tpu.memory_space<vmem>>, vector<2x768xf32>,
    %c0_i32_9 = arith.constant 0 : i32
    %13 = arith.cmpi eq, %arg1, %c0_i32_9 : i32
    %14 = arith.extui %13 : i1 to i32
    %c0_i32_10 = arith.constant 0 : i32
    %15 = arith.cmpi ne, %14, %c0_i32_10 : i32
    scf.if %15 {
      %c0_11 = arith.constant 0 : index
      %c0_12 = arith.constant 0 : index
      %16 = vector.load %arg7[%c0_11, %c0_12] : memref<2x768xf32, #tpu.memory_space<vmem>>, vector<2x768xf32>
      %17 = math.tanh %16 : vector<2x768xf32>
      %18 = arith.truncf %17 : vector<2x768xf32> to vector<2x768xbf16>
      %c0_13 = arith.constant 0 : index
      %c0_14 = arith.constant 0 : index
      %19 = vector.load %arg4[%c0_13, %c0_14] : memref<768x128xbf16, #tpu.memory_space<vmem>>, vector<768x128xbf16>
      %cst_15 = arith.constant dense<0.000000e+00> : vector<2x128xf32>
      %20 = tpu.matmul %18, %19, %cst_15 {dimension_numbers = #tpu.dot_dimension_numbers<[1], [0], [0], [1], [0, 0, 1, 1], [], []>} : vector<2x768xbf16>, vector<768x128xbf16>, vector<2x128xf32> -> vector<2x128xf32>
      %c0_16 = arith.constant 0 : index
      %c0_17 = arith.constant 0 : index
      %21 = vector.load %arg5[%c0_16, %c0_17] : memref<1x128xf32, #tpu.memory_space<vmem>>, vector<1x128xf32>
      %22 = vector.broadcast %21 : vector<1x128xf32> to vector<2x128xf32>
      %23 = arith.addf %20, %22 : vector<2x128xf32>
      %cst_18 = arith.constant dense<0xFF800000> : vector<2xf32>
      %24 = vector.multi_reduction <maximumf>, %23, %cst_18 [1] : vector<2x128xf32> to vector<2xf32>
      %25 = vector.shape_cast %24 : vector<2xf32> to vector<2x1xf32>
      %26 = vector.broadcast %25 : vector<2x1xf32> to vector<2x128xf32>
      %27 = arith.subf %23, %26 : vector<2x128xf32>
      %28 = math.exp %27 : vector<2x128xf32>
      %cst_19 = arith.constant dense<0.000000e+00> : vector<2xf32>
      %29 = vector.multi_reduction <add>, %28, %cst_19 [1] : vector<2x128xf32> to vector<2xf32>
      %30 = vector.shape_cast %29 : vector<2xf32> to vector<2x1xf32>
      %31 = tpu.reciprocal %30 {approx = true} : vector<2x1xf32> -> vector<2x1xf32>
      %32 = vector.broadcast %31 : vector<2x1xf32> to vector<2x128xf32>
      %33 = arith.mulf %28, %32 : vector<2x128xf32>
      %c0_20 = arith.constant 0 : index
      %c0_21 = arith.constant 0 : index
      %34 = vector.load %arg6[%c0_20, %c0_21] : memref<2x128xf32, #tpu.memory_space<vmem>>, vector<2x128xf32>
      tpu.vector_store %arg6[%c0_20, %c0_21], %33 {strides = array<i32>} : memref<2x128xf32, #tpu.memory_space<vmem>>, vector<2x128xf32>,
    } else {
    }
    return
  }
  func.func @transform_0(%arg0: i32, %arg1: i32) -> (i32, i32, i32) {
    %c0_i32 = arith.constant 0 : i32
    %c0_i32_0 = arith.constant 0 : i32
    return %arg0, %arg1, %c0_i32 : i32, i32, i32
  }
  func.func @transform_1(%arg0: i32, %arg1: i32) -> (i32, i32) {
    %c0_i32 = arith.constant 0 : i32
    return %arg0, %arg1 : i32, i32
  }
  func.func @transform_2(%arg0: i32, %arg1: i32) -> (i32, i32) {
    %c0_i32 = arith.constant 0 : i32
    %c0_i32_0 = arith.constant 0 : i32
    %c0_i32_1 = arith.constant 0 : i32
    return %c0_i32, %c0_i32_0 : i32, i32
  }
  func.func @transform_3(%arg0: i32, %arg1: i32) -> (i32, i32) {
    %c0_i32 = arith.constant 0 : i32
    %c0_i32_0 = arith.constant 0 : i32
    %c0_i32_1 = arith.constant 0 : i32
    return %c0_i32, %c0_i32_0 : i32, i32
  }
  func.func @transform_4(%arg0: i32, %arg1: i32) -> (i32, i32) {
    %c0_i32 = arith.constant 0 : i32
    %c0_i32_0 = arith.constant 0 : i32
    return %arg0, %c0_i32 : i32, i32
  }
}

</mosaic_0001>

<llo_original>
// kernel: tpu_custom_call.1
$region0: #{tpu_custom_call.1}
  #allocation0 [shape = 'u32[]', space=smem, size = 0x4, offset = 0x4, fixed_abs, tag = 'smem constant byte address 0x4 - core index']
  #allocation1 [shape = 'u32[144,128]{1,0:T(1,128)}', space=vmem, size = 0x12000, scoped, tag = 'internal scratch']
  #allocation2 [shape = 'f32[2,768]{1,0:T(2,128)}', space=vmem, size = 0x1800, scoped, tag = 'scratch operand']
  %s0 = inlined_call_operand.hbm [shape: bf16[2,8,768], index: 0, kind: input, shape index: {}]
  %s1 = inlined_call_operand.vmem [shape: f32[2,8], index: 1, kind: input, shape index: {}]
  %s2 = inlined_call_operand.hbm [shape: bf16[768,128], index: 2, kind: input, shape index: {}]
  %s3 = inlined_call_operand.vmem [shape: f32[1,128], index: 3, kind: input, shape index: {}]
  %s4 = inlined_call_operand.hbm [shape: f32[2,128], index: 4, kind: output, shape index: {}]
  %s5 = sld [smem:[#allocation0]]
  $region42: #{tpu_custom_call.1} parent=0
    _
  %s7 = ssub.s32 1, %s5
  %s8 = scalar_select 0, %s7, %s5
  $region1: #{tpu_custom_call.1} parent=0
    #allocation3 [shape = 'u8[24576]{0}', space=vmem, size = 0x6000, scoped, tag = 'input window, operand 0, single buffered']
    #allocation4 [shape = 's32[1]{0}', space=sflag, size = 0x4, scoped, tag = 'scoped memory for tpu_custom_call.1']
    #allocation5 [shape = 's32[1]{0}', space=sflag, size = 0x4, scoped, tag = 'scoped memory for tpu_custom_call.1']
    #allocation6 [shape = 'u8[196608]{0}', space=vmem, size = 0x30000, scoped, tag = 'input window, operand 2, single buffered']
    #allocation7 [shape = 's32[1]{0}', space=sflag, size = 0x4, scoped, tag = 'scoped memory for tpu_custom_call.1']
    #allocation8 [shape = 'u8[1024]{0}', space=vmem, size = 0x400, scoped, tag = 'output window, operand 0, single buffered']
    %9 = vsyncpa [#allocation4], 0
    %10 = vsyncpa [#allocation7], 0
    %11 = vsyncpa [#allocation5], 0
    // Predicated region
    $region2: #{tpu_custom_call.1} parent=1 // pred_check
      _
    $region3: #{tpu_custom_call.1} parent=1 // pred_check_branch
      %13 = sbr.rel (0) target = $region5
    $region4: #{tpu_custom_call.1} parent=1 // pred_region
      %s15 = ssub.s32 768, 768
      %16 = vsyncadd [#allocation4], %s15
      %s17 = sshll.u32 [#allocation3], 4
      %s18 = int_to_ptr.vmem [resolvable:$true] %s17
      %23 = dma.hbm_to_vmem [thread:$0]  %s0, 768, %s18, [#allocation4], 384, 384, 24
    $region5: #{tpu_custom_call.1} parent=1 // pred_fallthru
      _
    // Predicated region
    $region6: #{tpu_custom_call.1} parent=1 // pred_check
      _
    $region7: #{tpu_custom_call.1} parent=1 // pred_check_branch
      %25 = sbr.rel (0) target = $region9
    $region8: #{tpu_custom_call.1} parent=1 // pred_region
      _
    $region9: #{tpu_custom_call.1} parent=1 // pred_fallthru
      _
    // Predicated region
    $region10: #{tpu_custom_call.1} parent=1 // pred_check
      _
    $region11: #{tpu_custom_call.1} parent=1 // pred_check_branch
      %27 = sbr.rel (0) target = $region13
    $region12: #{tpu_custom_call.1} parent=1 // pred_region
      %s29 = ssub.s32 6144, 6144
      %30 = vsyncadd [#allocation7], %s29
      %s31 = sshll.u32 [#allocation6], 4
      %s32 = int_to_ptr.vmem [resolvable:$true] %s31
      %37 = dma.hbm_to_vmem [thread:$0]  %s2, 6144, %s32, [#allocation7], 64, 64, 4
    $region13: #{tpu_custom_call.1} parent=1 // pred_fallthru
      _
    // Predicated region
    $region14: #{tpu_custom_call.1} parent=1 // pred_check
      _
    $region15: #{tpu_custom_call.1} parent=1 // pred_check_branch
      %39 = sbr.rel (0) target = $region17
    $region16: #{tpu_custom_call.1} parent=1 // pred_region
      _
    $region17: #{tpu_custom_call.1} parent=1 // pred_fallthru
      _
    // Predicated region
    $region18: #{tpu_custom_call.1} parent=1 // pred_check
      _
    $region19: #{tpu_custom_call.1} parent=1 // pred_check_branch
      %41 = sbr.rel (0) target = $region21
    $region20: #{tpu_custom_call.1} parent=1 // pred_region
      %42 = dma.done [#allocation4], 768
    $region21: #{tpu_custom_call.1} parent=1 // pred_fallthru
      _
    // Predicated region
    $region22: #{tpu_custom_call.1} parent=1 // pred_check
      _
    $region23: #{tpu_custom_call.1} parent=1 // pred_check_branch
      %44 = sbr.rel (0) target = $region25
    $region24: #{tpu_custom_call.1} parent=1 // pred_region
      %45 = dma.done [#allocation7], 6144
    $region25: #{tpu_custom_call.1} parent=1 // pred_fallthru
      _
    %p47 = scmp.eq.s32.totalorder 0, 0
    // Predicated region
    $region26: #{tpu_custom_call.1} parent=1 // pred_check
      %p48 = pneg %p47
    $region27: #{tpu_custom_call.1} parent=1 // pred_check_branch
      %50 = sbr.rel (%p48) target = $region29
    $region28: #{tpu_custom_call.1} parent=1 // pred_region
      %51 = vst [vmem:[#allocation2] sm:$0xff] 0.0
      %52 = vst [vmem:[#allocation2 + $0x8] sm:$0xf] 0.0
    $region29: #{tpu_custom_call.1} parent=1 // pred_fallthru
      _
    %v53 = vld [vmem:[#allocation3] sm:$0xff]
    %v54 = vld [vmem:[#allocation3 + $0x8] sm:$0xff]
    %v55 = vld [vmem:[#allocation3 + $0x10] sm:$0xff]
    %v56 = vld [vmem:[#allocation3 + $0x18] sm:$0xff]
    %v57 = vld [vmem:[#allocation3 + $0x20] sm:$0xff]
    %v58 = vld [vmem:[#allocation3 + $0x28] sm:$0xff]
    %v59 = vunpack.c.l.bf16 %v53
    %v60 = vunpack.c.h.bf16 %v53
    %v61 = vunpack.c.l.bf16 %v54
    %v62 = vunpack.c.h.bf16 %v54
    %v63 = vunpack.c.l.bf16 %v55
    %v64 = vunpack.c.h.bf16 %v55
    %v65 = vunpack.c.l.bf16 %v56
    %v66 = vunpack.c.h.bf16 %v56
    %v67 = vunpack.c.l.bf16 %v57
    %v68 = vunpack.c.h.bf16 %v57
    %v69 = vunpack.c.l.bf16 %v58
    %v70 = vunpack.c.h.bf16 %v58
    %v71 = vld [vmem:[%s1] sm:$0x3]
    %v72 = vlaneseq
    %v73 = vshrl.u32 %v72, 7
    %v74 = vsub.s32 0, %v73
    %v75 = vrot.slane %v71, %v74
    %77 = vbcast.lane.b32.xlu0 %v75, 256
    %v78 = vpop.permute.xlu0 %77
    %v79 = vlaneseq
    %v80 = vshrl.u32 %v79, 7
    %v81 = vsub.s32 1, %v80
    %v82 = vrot.slane %v71, %v81
    %84 = vbcast.lane.b32.xlu0 %v82, 256
    %v85 = vpop.permute.xlu0 %84
    %v86 = vmul.f32 %v59, %v78
    %v87 = vmul.f32 %v60, %v78
    %v88 = vmul.f32 %v61, %v78
    %v89 = vmul.f32 %v62, %v78
    %v90 = vmul.f32 %v63, %v78
    %v91 = vmul.f32 %v64, %v78
    %v92 = vmul.f32 %v65, %v85
    %v93 = vmul.f32 %v66, %v85
    %v94 = vmul.f32 %v67, %v85
    %v95 = vmul.f32 %v68, %v85
    %v96 = vmul.f32 %v69, %v85
    %v97 = vmul.f32 %v70, %v85
    %v98 = vld [vmem:[#allocation2] sm:$0xff]
    %v99 = vld [vmem:[#allocation2 + $0x8] sm:$0xf]
    %v100 = vrot.slane %v86, 4
    %v101 = vadd.f32 %v86, %v100
    %v102 = vrot.slane %v101, 2
    %v103 = vadd.f32 %v101, %v102
    %v104 = vrot.slane %v103, 1
    %v105 = vadd.f32 %v103, %v104
    %v106 = vrot.slane %v87, 4
    %v107 = vadd.f32 %v87, %v106
    %v108 = vrot.slane %v107, 2
    %v109 = vadd.f32 %v107, %v108
    %v110 = vrot.slane %v109, 1
    %v111 = vadd.f32 %v109, %v110
    %v112 = vrot.slane %v88, 4
    %v113 = vadd.f32 %v88, %v112
    %v114 = vrot.slane %v113, 2
    %v115 = vadd.f32 %v113, %v114
    %v116 = vrot.slane %v115, 1
    %v117 = vadd.f32 %v115, %v116
    %v118 = vrot.slane %v89, 4
    %v119 = vadd.f32 %v89, %v118
    %v120 = vrot.slane %v119, 2
    %v121 = vadd.f32 %v119, %v120
    %v122 = vrot.slane %v121, 1
    %v123 = vadd.f32 %v121, %v122
    %v124 = vrot.slane %v90, 4
    %v125 = vadd.f32 %v90, %v124
    %v126 = vrot.slane %v125, 2
    %v127 = vadd.f32 %v125, %v126
    %v128 = vrot.slane %v127, 1
    %v129 = vadd.f32 %v127, %v128
    %v130 = vrot.slane %v91, 4
    %v131 = vadd.f32 %v91, %v130
    %v132 = vrot.slane %v131, 2
    %v133 = vadd.f32 %v131, %v132
    %v134 = vrot.slane %v133, 1
    %v135 = vadd.f32 %v133, %v134
    %v136 = vrot.slane %v92, 4
    %v137 = vadd.f32 %v92, %v136
    %v138 = vrot.slane %v137, 2
    %v139 = vadd.f32 %v137, %v138
    %v140 = vrot.slane %v139, 1
    %v141 = vadd.f32 %v139, %v140
    %v142 = vrot.slane %v93, 4
    %v143 = vadd.f32 %v93, %v142
    %v144 = vrot.slane %v143, 2
    %v145 = vadd.f32 %v143, %v144
    %v146 = vrot.slane %v145, 1
    %v147 = vadd.f32 %v145, %v146
    %v148 = vrot.slane %v94, 4
    %v149 = vadd.f32 %v94, %v148
    %v150 = vrot.slane %v149, 2
    %v151 = vadd.f32 %v149, %v150
    %v152 = vrot.slane %v151, 1
    %v153 = vadd.f32 %v151, %v152
    %v154 = vrot.slane %v95, 4
    %v155 = vadd.f32 %v95, %v154
    %v156 = vrot.slane %v155, 2
    %v157 = vadd.f32 %v155, %v156
    %v158 = vrot.slane %v157, 1
    %v159 = vadd.f32 %v157, %v158
    %v160 = vrot.slane %v96, 4
    %v161 = vadd.f32 %v96, %v160
    %v162 = vrot.slane %v161, 2
    %v163 = vadd.f32 %v161, %v162
    %v164 = vrot.slane %v163, 1
    %v165 = vadd.f32 %v163, %v164
    %v166 = vrot.slane %v97, 4
    %v167 = vadd.f32 %v97, %v166
    %v168 = vrot.slane %v167, 2
    %v169 = vadd.f32 %v167, %v168
    %v170 = vrot.slane %v169, 1
    %v171 = vadd.f32 %v169, %v170
    %v184 = vcombine.low %v105, %v111
    %v185 = vcombine.low %v117, %v123
    %v187 = vunpack.c.l.s4 1983009808
    %v188 = vunpack.c.0.s8 %v187
    %v189 = vlaneseq
    %v190 = vshrl.u32 %v189, 7
    %v191 = vsub.s32 %v188, %v190
    %v192 = vrot.slane %v184, %v191
    %v194 = vunpack.c.l.s4 1983009808
    %v195 = vunpack.c.0.s8 %v194
    %v196 = vlaneseq
    %v197 = vshrl.u32 %v196, 7
    %v198 = vsub.s32 %v195, %v197
    %v199 = vrot.slane %v185, %v198
    %v200 = vcombine.low %v192, %v199
    %v201 = vcombine.low %v129, %v135
    %v203 = vunpack.c.l.s4 1983009808
    %v204 = vunpack.c.0.s8 %v203
    %v205 = vlaneseq
    %v206 = vshrl.u32 %v205, 7
    %v207 = vsub.s32 %v204, %v206
    %v208 = vrot.slane %v201, %v207
    %v209 = vcombine.low %v141, %v147
    %v210 = vcombine.low %v153, %v159
    %v212 = vunpack.c.l.s4 1983009808
    %v213 = vunpack.c.0.s8 %v212
    %v214 = vlaneseq
    %v215 = vshrl.u32 %v214, 7
    %v216 = vsub.s32 %v213, %v215
    %v217 = vrot.slane %v209, %v216
    %v219 = vunpack.c.l.s4 1983009808
    %v220 = vunpack.c.0.s8 %v219
    %v221 = vlaneseq
    %v222 = vshrl.u32 %v221, 7
    %v223 = vsub.s32 %v220, %v222
    %v224 = vrot.slane %v210, %v223
    %v225 = vcombine.low %v217, %v224
    %v226 = vcombine.low %v165, %v171
    %v228 = vunpack.c.l.s4 1983009808
    %v229 = vunpack.c.0.s8 %v228
    %v230 = vlaneseq
    %v231 = vshrl.u32 %v230, 7
    %v232 = vsub.s32 %v229, %v231
    %v233 = vrot.slane %v226, %v232
    %vm234 = vcmask 1044484
    %v235 = vsel %vm234, %v200, %v200
    %vm236 = vcmask 1046534
    %v237 = vsel %vm236, %v200, %v235
    %v238 = vrot.slane %v225, 7
    %vm239 = vcmask 1041409
    %v240 = vsel %vm239, %v238, %v237
    %vm241 = vcmask 1043459
    %v242 = vsel %vm241, %v238, %v240
    %vm243 = vcmask 1045509
    %v244 = vsel %vm243, %v238, %v242
    %vm245 = vcmask 1047559
    %v246 = vsel %vm245, %v238, %v244
    %v247 = vsel %vm234, %v208, %v208
    %v248 = vsel %vm236, %v208, %v247
    %v249 = vrot.slane %v233, 7
    %v250 = vsel %vm239, %v249, %v248
    %v251 = vsel %vm241, %v249, %v250
    %v252 = vsel %vm243, %v249, %v251
    %v253 = vsel %vm245, %v249, %v252
    %v256 = vadd.f32 %v98, %v246
    %v257 = vadd.f32 %v99, %v253
    %258 = vst [vmem:[#allocation2] sm:$0xff] %v256
    %259 = vst [vmem:[#allocation2 + $0x8] sm:$0xf] %v257
    // Predicated region
    $region30: #{tpu_custom_call.1} parent=1 // pred_check
      %p260 = pneg %p47
    $region31: #{tpu_custom_call.1} parent=1 // pred_check_branch
      %262 = sbr.rel (%p260) target = $region33
    $region32: #{tpu_custom_call.1} parent=1 // pred_region
      %v263 = vld [vmem:[#allocation2] sm:$0xff]
      %v264 = vld [vmem:[#allocation2 + $0x8] sm:$0xf]
      %v265 = vtanh.pop %v263
      %v266 = vtanh.pop %v264
      %v269 = vcombine.high %v265, %v265
      %v271 = vunpack.c.l.s4 1983009808
      %v272 = vunpack.c.0.s8 %v271
      %v273 = vlaneseq
      %v274 = vshrl.u32 %v273, 7
      %v275 = vsub.s32 %v272, %v274
      %v276 = vrot.slane %v265, %v275
      %v278 = vunpack.c.l.s4 1983009808
      %v279 = vunpack.c.0.s8 %v278
      %v280 = vlaneseq
      %v281 = vshrl.u32 %v280, 7
      %v282 = vsub.s32 %v279, %v281
      %v283 = vrot.slane %v269, %v282
      %v284 = vcombine.high %v276, %v276
      %v285 = vcombine.high %v283, %v283
      %v287 = vunpack.c.l.s4 1983009808
      %v288 = vunpack.c.0.s8 %v287
      %v289 = vlaneseq
      %v290 = vshrl.u32 %v289, 7
      %v291 = vsub.s32 %v288, %v290
      %v292 = vrot.slane %v266, %v291
      %v293 = vcombine.high %v292, %v292
      %v300 = vpack.c.bf16 %v276, %v276
      %v301 = vpack.c.bf16 %v284, %v284
      %v302 = vpack.c.bf16 %v283, %v283
      %v303 = vpack.c.bf16 %v285, %v285
      %v304 = vpack.c.bf16 %v292, %v292
      %v305 = vpack.c.bf16 %v293, %v293
      %v306 = vld [vmem:[#allocation6] sm:$0xf]
      %v307 = vld [vmem:[#allocation6 + $0x4] sm:$0xf]
      %v308 = vld [vmem:[#allocation6 + $0x8] sm:$0xf]
      %v309 = vld [vmem:[#allocation6 + $0xc] sm:$0xf]
      %v310 = vld [vmem:[#allocation6 + $0x10] sm:$0xf]
      %v311 = vld [vmem:[#allocation6 + $0x14] sm:$0xf]
      %v312 = vld [vmem:[#allocation6 + $0x18] sm:$0xf]
      %v313 = vld [vmem:[#allocation6 + $0x1c] sm:$0xf]
      %v314 = vld [vmem:[#allocation6 + $0x20] sm:$0xf]
      %v315 = vld [vmem:[#allocation6 + $0x24] sm:$0xf]
      %v316 = vld [vmem:[#allocation6 + $0x28] sm:$0xf]
      %v317 = vld [vmem:[#allocation6 + $0x2c] sm:$0xf]
      %v318 = vld [vmem:[#allocation6 + $0x30] sm:$0xf]
      %v319 = vld [vmem:[#allocation6 + $0x34] sm:$0xf]
      %v320 = vld [vmem:[#allocation6 + $0x38] sm:$0xf]
      %v321 = vld [vmem:[#allocation6 + $0x3c] sm:$0xf]
      %v322 = vld [vmem:[#allocation6 + $0x40] sm:$0xf]
      %v323 = vld [vmem:[#allocation6 + $0x44] sm:$0xf]
      %v324 = vld [vmem:[#allocation6 + $0x48] sm:$0xf]
      %v325 = vld [vmem:[#allocation6 + $0x4c] sm:$0xf]
      %v326 = vld [vmem:[#allocation6 + $0x50] sm:$0xf]
      %v327 = vld [vmem:[#allocation6 + $0x54] sm:$0xf]
      %v328 = vld [vmem:[#allocation6 + $0x58] sm:$0xf]
      %v329 = vld [vmem:[#allocation6 + $0x5c] sm:$0xf]
      %v330 = vld [vmem:[#allocation6 + $0x60] sm:$0xf]
      %v331 = vld [vmem:[#allocation6 + $0x64] sm:$0xf]
      %v332 = vld [vmem:[#allocation6 + $0x68] sm:$0xf]
      %v333 = vld [vmem:[#allocation6 + $0x6c] sm:$0xf]
      %v334 = vld [vmem:[#allocation6 + $0x70] sm:$0xf]
      %v335 = vld [vmem:[#allocation6 + $0x74] sm:$0xf]
      %v336 = vld [vmem:[#allocation6 + $0x78] sm:$0xf]
      %v337 = vld [vmem:[#allocation6 + $0x7c] sm:$0xf]
      %v338 = vld [vmem:[#allocation6 + $0x80] sm:$0xf]
      %v339 = vld [vmem:[#allocation6 + $0x84] sm:$0xf]
      %v340 = vld [vmem:[#allocation6 + $0x88] sm:$0xf]
      %v341 = vld [vmem:[#allocation6 + $0x8c] sm:$0xf]
      %v342 = vld [vmem:[#allocation6 + $0x90] sm:$0xf]
      %v343 = vld [vmem:[#allocation6 + $0x94] sm:$0xf]
      %v344 = vld [vmem:[#allocation6 + $0x98] sm:$0xf]
      %v345 = vld [vmem:[#allocation6 + $0x9c] sm:$0xf]
      %v346 = vld [vmem:[#allocation6 + $0xa0] sm:$0xf]
      %v347 = vld [vmem:[#allocation6 + $0xa4] sm:$0xf]
      %v348 = vld [vmem:[#allocation6 + $0xa8] sm:$0xf]
      %v349 = vld [vmem:[#allocation6 + $0xac] sm:$0xf]
      %v350 = vld [vmem:[#allocation6 + $0xb0] sm:$0xf]
      %v351 = vld [vmem:[#allocation6 + $0xb4] sm:$0xf]
      %v352 = vld [vmem:[#allocation6 + $0xb8] sm:$0xf]
      %v353 = vld [vmem:[#allocation6 + $0xbc] sm:$0xf]
      %v354 = vld [vmem:[#allocation6 + $0xc0] sm:$0xf]
      %v355 = vld [vmem:[#allocation6 + $0xc4] sm:$0xf]
      %v356 = vld [vmem:[#allocation6 + $0xc8] sm:$0xf]
      %v357 = vld [vmem:[#allocation6 + $0xcc] sm:$0xf]
      %v358 = vld [vmem:[#allocation6 + $0xd0] sm:$0xf]
      %v359 = vld [vmem:[#allocation6 + $0xd4] sm:$0xf]
      %v360 = vld [vmem:[#allocation6 + $0xd8] sm:$0xf]
      %v361 = vld [vmem:[#allocation6 + $0xdc] sm:$0xf]
      %v362 = vld [vmem:[#allocation6 + $0xe0] sm:$0xf]
      %v363 = vld [vmem:[#allocation6 + $0xe4] sm:$0xf]
      %v364 = vld [vmem:[#allocation6 + $0xe8] sm:$0xf]
      %v365 = vld [vmem:[#allocation6 + $0xec] sm:$0xf]
      %v366 = vld [vmem:[#allocation6 + $0xf0] sm:$0xf]
      %v367 = vld [vmem:[#allocation6 + $0xf4] sm:$0xf]
      %v368 = vld [vmem:[#allocation6 + $0xf8] sm:$0xf]
      %v369 = vld [vmem:[#allocation6 + $0xfc] sm:$0xf]
      %v370 = vld [vmem:[#allocation6 + $0x100] sm:$0xf]
      %v371 = vld [vmem:[#allocation6 + $0x104] sm:$0xf]
      %v372 = vld [vmem:[#allocation6 + $0x108] sm:$0xf]
      %v373 = vld [vmem:[#allocation6 + $0x10c] sm:$0xf]
      %v374 = vld [vmem:[#allocation6 + $0x110] sm:$0xf]
      %v375 = vld [vmem:[#allocation6 + $0x114] sm:$0xf]
      %v376 = vld [vmem:[#allocation6 + $0x118] sm:$0xf]
      %v377 = vld [vmem:[#allocation6 + $0x11c] sm:$0xf]
      %v378 = vld [vmem:[#allocation6 + $0x120] sm:$0xf]
      %v379 = vld [vmem:[#allocation6 + $0x124] sm:$0xf]
      %v380 = vld [vmem:[#allocation6 + $0x128] sm:$0xf]
      %v381 = vld [vmem:[#allocation6 + $0x12c] sm:$0xf]
      %v382 = vld [vmem:[#allocation6 + $0x130] sm:$0xf]
      %v383 = vld [vmem:[#allocation6 + $0x134] sm:$0xf]
      %v384 = vld [vmem:[#allocation6 + $0x138] sm:$0xf]
      %v385 = vld [vmem:[#allocation6 + $0x13c] sm:$0xf]
      %v386 = vld [vmem:[#allocation6 + $0x140] sm:$0xf]
      %v387 = vld [vmem:[#allocation6 + $0x144] sm:$0xf]
      %v388 = vld [vmem:[#allocation6 + $0x148] sm:$0xf]
      %v389 = vld [vmem:[#allocation6 + $0x14c] sm:$0xf]
      %v390 = vld [vmem:[#allocation6 + $0x150] sm:$0xf]
      %v391 = vld [vmem:[#allocation6 + $0x154] sm:$0xf]
      %v392 = vld [vmem:[#allocation6 + $0x158] sm:$0xf]
      %v393 = vld [vmem:[#allocation6 + $0x15c] sm:$0xf]
      %v394 = vld [vmem:[#allocation6 + $0x160] sm:$0xf]
      %v395 = vld [vmem:[#allocation6 + $0x164] sm:$0xf]
      %v396 = vld [vmem:[#allocation6 + $0x168] sm:$0xf]
      %v397 = vld [vmem:[#allocation6 + $0x16c] sm:$0xf]
      %v398 = vld [vmem:[#allocation6 + $0x170] sm:$0xf]
      %v399 = vld [vmem:[#allocation6 + $0x174] sm:$0xf]
      %v400 = vld [vmem:[#allocation6 + $0x178] sm:$0xf]
      %v401 = vld [vmem:[#allocation6 + $0x17c] sm:$0xf]
      %v402 = vld [vmem:[%s3] sm:$0x1]
      %v404 = vlaneseq
      %v405 = vshrl.u32 %v404, 7
      %v406 = vsub.s32 0, %v405
      %v407 = vrot.slane %v402, %v406
      %v505 = vunpack.c.l.b16 %v306
      %v506 = vunpack.c.l.b16 %v307
      %v507 = vunpack.c.l.b16 %v308
      %v508 = vunpack.c.l.b16 %v309
      %v509 = vunpack.c.l.b16 %v310
      %v510 = vunpack.c.l.b16 %v311
      %v511 = vunpack.c.l.b16 %v312
      %v512 = vunpack.c.l.b16 %v313
      %v513 = vunpack.c.l.b16 %v314
      %v514 = vunpack.c.l.b16 %v315
      %v515 = vunpack.c.l.b16 %v316
      %v516 = vunpack.c.l.b16 %v317
      %v517 = vunpack.c.l.b16 %v318
      %v518 = vunpack.c.l.b16 %v319
      %v519 = vunpack.c.l.b16 %v320
      %v520 = vunpack.c.l.b16 %v321
      %v521 = vunpack.c.l.b16 %v322
      %v522 = vunpack.c.l.b16 %v323
      %v523 = vunpack.c.l.b16 %v324
      %v524 = vunpack.c.l.b16 %v325
      %v525 = vunpack.c.l.b16 %v326
      %v526 = vunpack.c.l.b16 %v327
      %v527 = vunpack.c.l.b16 %v328
      %v528 = vunpack.c.l.b16 %v329
      %v529 = vunpack.c.l.b16 %v330
      %v530 = vunpack.c.l.b16 %v331
      %v531 = vunpack.c.l.b16 %v332
      %v532 = vunpack.c.l.b16 %v333
      %v533 = vunpack.c.l.b16 %v334
      %v534 = vunpack.c.l.b16 %v335
      %v535 = vunpack.c.l.b16 %v336
      %v536 = vunpack.c.l.b16 %v337
      %v537 = vunpack.c.l.b16 %v338
      %v538 = vunpack.c.l.b16 %v339
      %v539 = vunpack.c.l.b16 %v340
      %v540 = vunpack.c.l.b16 %v341
      %v541 = vunpack.c.l.b16 %v342
      %v542 = vunpack.c.l.b16 %v343
      %v543 = vunpack.c.l.b16 %v344
      %v544 = vunpack.c.l.b16 %v345
      %v545 = vunpack.c.l.b16 %v346
      %v546 = vunpack.c.l.b16 %v347
      %v547 = vunpack.c.l.b16 %v348
      %v548 = vunpack.c.l.b16 %v349
      %v549 = vunpack.c.l.b16 %v350
      %v550 = vunpack.c.l.b16 %v351
      %v551 = vunpack.c.l.b16 %v352
      %v552 = vunpack.c.l.b16 %v353
      %v553 = vunpack.c.l.b16 %v354
      %v554 = vunpack.c.l.b16 %v355
      %v555 = vunpack.c.l.b16 %v356
      %v556 = vunpack.c.l.b16 %v357
      %v557 = vunpack.c.l.b16 %v358
      %v558 = vunpack.c.l.b16 %v359
      %v559 = vunpack.c.l.b16 %v360
      %v560 = vunpack.c.l.b16 %v361
      %v561 = vunpack.c.l.b16 %v362
      %v562 = vunpack.c.l.b16 %v363
      %v563 = vunpack.c.l.b16 %v364
      %v564 = vunpack.c.l.b16 %v365
      %v565 = vunpack.c.l.b16 %v366
      %v566 = vunpack.c.l.b16 %v367
      %v567 = vunpack.c.l.b16 %v368
      %v568 = vunpack.c.l.b16 %v369
      %v569 = vunpack.c.l.b16 %v370
      %v570 = vunpack.c.l.b16 %v371
      %v571 = vunpack.c.l.b16 %v372
      %v572 = vunpack.c.l.b16 %v373
      %v573 = vunpack.c.l.b16 %v374
      %v574 = vunpack.c.l.b16 %v375
      %v575 = vunpack.c.l.b16 %v376
      %v576 = vunpack.c.l.b16 %v377
      %v577 = vunpack.c.l.b16 %v378
      %v578 = vunpack.c.l.b16 %v379
      %v579 = vunpack.c.l.b16 %v380
      %v580 = vunpack.c.l.b16 %v381
      %v581 = vunpack.c.l.b16 %v382
      %v582 = vunpack.c.l.b16 %v383
      %v583 = vunpack.c.l.b16 %v384
      %v584 = vunpack.c.l.b16 %v385
      %v585 = vunpack.c.l.b16 %v386
      %v586 = vunpack.c.l.b16 %v387
      %v587 = vunpack.c.l.b16 %v388
      %v588 = vunpack.c.l.b16 %v389
      %v589 = vunpack.c.l.b16 %v390
      %v590 = vunpack.c.l.b16 %v391
      %v591 = vunpack.c.l.b16 %v392
      %v592 = vunpack.c.l.b16 %v393
      %v593 = vunpack.c.l.b16 %v394
      %v594 = vunpack.c.l.b16 %v395
      %v595 = vunpack.c.l.b16 %v396
      %v596 = vunpack.c.l.b16 %v397
      %v597 = vunpack.c.l.b16 %v398
      %v598 = vunpack.c.l.b16 %v399
      %v599 = vunpack.c.l.b16 %v400
      %v600 = vunpack.c.l.b16 %v401
      %v601 = vpack.c.b16 %v506, %v505
      %v602 = vpack.c.b16 %v508, %v507
      %v603 = vpack.c.b16 %v510, %v509
      %v604 = vpack.c.b16 %v512, %v511
      %v605 = vpack.c.b16 %v514, %v513
      %v606 = vpack.c.b16 %v516, %v515
      %v607 = vpack.c.b16 %v518, %v517
      %v608 = vpack.c.b16 %v520, %v519
      %v609 = vpack.c.b16 %v522, %v521
      %v610 = vpack.c.b16 %v524, %v523
      %v611 = vpack.c.b16 %v526, %v525
      %v612 = vpack.c.b16 %v528, %v527
      %v613 = vpack.c.b16 %v530, %v529
      %v614 = vpack.c.b16 %v532, %v531
      %v615 = vpack.c.b16 %v534, %v533
      %v616 = vpack.c.b16 %v536, %v535
      %v617 = vpack.c.b16 %v538, %v537
      %v618 = vpack.c.b16 %v540, %v539
      %v619 = vpack.c.b16 %v542, %v541
      %v620 = vpack.c.b16 %v544, %v543
      %v621 = vpack.c.b16 %v546, %v545
      %v622 = vpack.c.b16 %v548, %v547
      %v623 = vpack.c.b16 %v550, %v549
      %v624 = vpack.c.b16 %v552, %v551
      %v625 = vpack.c.b16 %v554, %v553
      %v626 = vpack.c.b16 %v556, %v555
      %v627 = vpack.c.b16 %v558, %v557
      %v628 = vpack.c.b16 %v560, %v559
      %v629 = vpack.c.b16 %v562, %v561
      %v630 = vpack.c.b16 %v564, %v563
      %v631 = vpack.c.b16 %v566, %v565
      %v632 = vpack.c.b16 %v568, %v567
      %v633 = vpack.c.b16 %v570, %v569
      %v634 = vpack.c.b16 %v572, %v571
      %v635 = vpack.c.b16 %v574, %v573
      %v636 = vpack.c.b16 %v576, %v575
      %v637 = vpack.c.b16 %v578, %v577
      %v638 = vpack.c.b16 %v580, %v579
      %v639 = vpack.c.b16 %v582, %v581
      %v640 = vpack.c.b16 %v584, %v583
      %v641 = vpack.c.b16 %v586, %v585
      %v642 = vpack.c.b16 %v588, %v587
      %v643 = vpack.c.b16 %v590, %v589
      %v644 = vpack.c.b16 %v592, %v591
      %v645 = vpack.c.b16 %v594, %v593
      %v646 = vpack.c.b16 %v596, %v595
      %v647 = vpack.c.b16 %v598, %v597
      %v648 = vpack.c.b16 %v600, %v599
      %697 = vmatprep.subr.bf16.mxu0 0
      %698 = vmatpush1.bf16.msra.mxu0 %v601
      %699 = vmatprep.subr.bf16.mxu0 0
      %700 = vmatpush1.bf16.msra.mxu0 %v602
      %701 = vmatprep.subr.bf16.mxu0 0
      %702 = vmatpush1.bf16.msra.mxu0 %v603
      %703 = vmatprep.subr.bf16.mxu0 0
      %704 = vmatpush1.bf16.msra.mxu0 %v604
      %705 = vmatprep.subr.bf16.mxu0 0
      %706 = vmatpush1.bf16.msra.mxu0 %v605
      %707 = vmatprep.subr.bf16.mxu0 0
      %708 = vmatpush1.bf16.msra.mxu0 %v606
      %709 = vmatprep.subr.bf16.mxu0 0
      %710 = vmatpush1.bf16.msra.mxu0 %v607
      %711 = vmatprep.subr.bf16.mxu0 0
      %712 = vmatpush1.bf16.msra.mxu0 %v608
      %713 = vmatprep.subr.bf16.mxu0 0
      %714 = vmatpush1.bf16.msra.mxu0 %v609
      %715 = vmatprep.subr.bf16.mxu0 0
      %716 = vmatpush1.bf16.msra.mxu0 %v610
      %717 = vmatprep.subr.bf16.mxu0 0
      %718 = vmatpush1.bf16.msra.mxu0 %v611
      %719 = vmatprep.subr.bf16.mxu0 0
      %720 = vmatpush1.bf16.msra.mxu0 %v612
      %721 = vmatprep.subr.bf16.mxu0 0
      %722 = vmatpush1.bf16.msra.mxu0 %v613
      %723 = vmatprep.subr.bf16.mxu0 0
      %724 = vmatpush1.bf16.msra.mxu0 %v614
      %725 = vmatprep.subr.bf16.mxu0 0
      %726 = vmatpush1.bf16.msra.mxu0 %v615
      %727 = vmatprep.subr.bf16.mxu0 0
      %728 = vmatpush1.bf16.msra.mxu0 %v616
      %729 = vmatprep.mubr.bf16.mxu0 %v301
      %730 = vmatmul.mubr.bf16.gmra.mrb[0].mxu0 %v300
      %v731 = vpop.f32.mrb[0].mxu0
      %v732 = vadd.f32 %v407, %v731
      %v733 = vpop.f32.mrb[0].mxu0
      %v734 = vpop.f32.mrb[0].mxu0
      %v735 = vpop.f32.mrb[0].mxu0
      %736 = vdwg.mxu0
      %737 = vmatprep.subr.bf16.mxu0 0
      %738 = vmatpush1.bf16.msra.mxu0 %v617
      %739 = vmatprep.subr.bf16.mxu0 0
      %740 = vmatpush1.bf16.msra.mxu0 %v618
      %741 = vmatprep.subr.bf16.mxu0 0
      %742 = vmatpush1.bf16.msra.mxu0 %v619
      %743 = vmatprep.subr.bf16.mxu0 0
      %744 = vmatpush1.bf16.msra.mxu0 %v620
      %745 = vmatprep.subr.bf16.mxu0 0
      %746 = vmatpush1.bf16.msra.mxu0 %v621
      %747 = vmatprep.subr.bf16.mxu0 0
      %748 = vmatpush1.bf16.msra.mxu0 %v622
      %749 = vmatprep.subr.bf16.mxu0 0
      %750 = vmatpush1.bf16.msra.mxu0 %v623
      %751 = vmatprep.subr.bf16.mxu0 0
      %752 = vmatpush1.bf16.msra.mxu0 %v624
      %753 = vmatprep.subr.bf16.mxu0 0
      %754 = vmatpush1.bf16.msra.mxu0 %v625
      %755 = vmatprep.subr.bf16.mxu0 0
      %756 = vmatpush1.bf16.msra.mxu0 %v626
      %757 = vmatprep.subr.bf16.mxu0 0
      %758 = vmatpush1.bf16.msra.mxu0 %v627
      %759 = vmatprep.subr.bf16.mxu0 0
      %760 = vmatpush1.bf16.msra.mxu0 %v628
      %761 = vmatprep.subr.bf16.mxu0 0
      %762 = vmatpush1.bf16.msra.mxu0 %v629
      %763 = vmatprep.subr.bf16.mxu0 0
      %764 = vmatpush1.bf16.msra.mxu0 %v630
      %765 = vmatprep.subr.bf16.mxu0 0
      %766 = vmatpush1.bf16.msra.mxu0 %v631
      %767 = vmatprep.subr.bf16.mxu0 0
      %768 = vmatpush1.bf16.msra.mxu0 %v632
      %769 = vmatprep.mubr.bf16.mxu0 %v303
      %770 = vmatmul.mubr.bf16.gmra.mrb[0].mxu0 %v302
      %v771 = vpop.f32.mrb[0].mxu0
      %v772 = vadd.f32 %v732, %v771
      %v773 = vpop.f32.mrb[0].mxu0
      %v774 = vpop.f32.mrb[0].mxu0
      %v775 = vpop.f32.mrb[0].mxu0
      %776 = vdwg.mxu0
      %777 = vmatprep.subr.bf16.mxu0 0
      %778 = vmatpush1.bf16.msra.mxu0 %v633
      %779 = vmatprep.subr.bf16.mxu0 0
      %780 = vmatpush1.bf16.msra.mxu0 %v634
      %781 = vmatprep.subr.bf16.mxu0 0
      %782 = vmatpush1.bf16.msra.mxu0 %v635
      %783 = vmatprep.subr.bf16.mxu0 0
      %784 = vmatpush1.bf16.msra.mxu0 %v636
      %785 = vmatprep.subr.bf16.mxu0 0
      %786 = vmatpush1.bf16.msra.mxu0 %v637
      %787 = vmatprep.subr.bf16.mxu0 0
      %788 = vmatpush1.bf16.msra.mxu0 %v638
      %789 = vmatprep.subr.bf16.mxu0 0
      %790 = vmatpush1.bf16.msra.mxu0 %v639
      %791 = vmatprep.subr.bf16.mxu0 0
      %792 = vmatpush1.bf16.msra.mxu0 %v640
      %793 = vmatprep.subr.bf16.mxu0 0
      %794 = vmatpush1.bf16.msra.mxu0 %v641
      %795 = vmatprep.subr.bf16.mxu0 0
      %796 = vmatpush1.bf16.msra.mxu0 %v642
      %797 = vmatprep.subr.bf16.mxu0 0
      %798 = vmatpush1.bf16.msra.mxu0 %v643
      %799 = vmatprep.subr.bf16.mxu0 0
      %800 = vmatpush1.bf16.msra.mxu0 %v644
      %801 = vmatprep.subr.bf16.mxu0 0
      %802 = vmatpush1.bf16.msra.mxu0 %v645
      %803 = vmatprep.subr.bf16.mxu0 0
      %804 = vmatpush1.bf16.msra.mxu0 %v646
      %805 = vmatprep.subr.bf16.mxu0 0
      %806 = vmatpush1.bf16.msra.mxu0 %v647
      %807 = vmatprep.subr.bf16.mxu0 0
      %808 = vmatpush1.bf16.msra.mxu0 %v648
      %809 = vmatprep.mubr.bf16.mxu0 %v305
      %810 = vmatmul.mubr.bf16.gmra.mrb[0].mxu0 %v304
      %v811 = vpop.f32.mrb[0].mxu0
      %v812 = vadd.f32 %v772, %v811
      %v813 = vpop.f32.mrb[0].mxu0
      %v814 = vpop.f32.mrb[0].mxu0
      %v815 = vpop.f32.mrb[0].mxu0
      %816 = vdwg.mxu0
      %vm817 = vcmask 1041408
      %v818 = vsel %vm817, %v812, -inf
      %819 = vmax.xlane.f32.xlu0 %v818
      %v820 = vpop.xlane.xlu0 %819
      %v821 = vsub.f32 %v812, %v820
      %v822 = vmul.f32 %v821, 1.442695
      %v823 = vpow.pop %v822
      %v824 = vsel %vm817, %v823, 0.0
      %825 = vadd.xlane.f32.xlu0 %v824
      %v826 = vpop.xlane.xlu0 %825
      %v827 = vrcp.pop %v826
      %v828 = vmul.f32 %v823, %v827
      %829 = vst [vmem:[#allocation8] sm:$0x3] %v828
    $region33: #{tpu_custom_call.1} parent=1 // pred_fallthru
      _
    // Predicated region
    $region34: #{tpu_custom_call.1} parent=1 // pred_check
      _
    $region35: #{tpu_custom_call.1} parent=1 // pred_check_branch
      %831 = sbr.rel (0) target = $region37
    $region36: #{tpu_custom_call.1} parent=1 // pred_region
      %s833 = ssub.s32 32, 32
      %834 = vsyncadd [#allocation5], %s833
      %s836 = sshll.u32 [#allocation8], 4
      %s837 = int_to_ptr.vmem [resolvable:$true] %s836
      %839 = dma.vmem_to_hbm [thread:$0]  %s837, 32, %s4, [#allocation5]
    $region37: #{tpu_custom_call.1} parent=1 // pred_fallthru
      _
    // Predicated region
    $region38: #{tpu_custom_call.1} parent=1 // pred_check
      _
    $region39: #{tpu_custom_call.1} parent=1 // pred_check_branch
      %841 = sbr.rel (0) target = $region41
    $region40: #{tpu_custom_call.1} parent=1 // pred_region
      %842 = dma.done [#allocation5], 32
    $region41: #{tpu_custom_call.1} parent=1 // pred_fallthru
      _
    %843 = vsyncpa [#allocation4], 1
    %844 = vsyncpa [#allocation7], 1
    %845 = vsyncpa [#allocation5], 1

</llo_original>
